<compile_context>
chip_gen: v6e
topology: v6e:2x2x1
jax: 0.10.0
libtpu: 0.0.40
codegen_flags: <defaults>
</compile_context>

<pallas_src>
import functools

import jax
import jax.numpy as jnp
from jax.experimental import pallas as pl
from jax.experimental.pallas import tpu as pltpu

_LANES = 128
_SUBLANES = 8
_TARGET_BYTES_PER_INPUT = 1 << 20     # ~1 MiB of DMA per input per grid step
_CHUNK_ROWS = 256                     # rolling-accumulator sub-chunk (multiple of 32)
_SPLIT_MIN_STEP_BYTES = 256 << 10     # only force >=2 grid steps if each step moves >= this


def _cdiv(a: int, b: int) -> int:
    return -(-a // b)


def _round_up(x: int, m: int) -> int:
    return _cdiv(x, m) * m


def _choose_tiling(total_rows: int, itemsize: int):
    """Pick (tile_rows, chunk_rows).

    Constant bytes/step across dtypes, rounded to the dtype's sublane packing
    (8 for f32, 16 for bf16, 32 for int8), and >= 2 grid steps for moderately
    sized inputs so the 'parallel' grid axis can use both v7x TensorCores.
    """
    packing = max(_SUBLANES, (_SUBLANES * 4) // itemsize)
    target = max(packing, _TARGET_BYTES_PER_INPUT // (itemsize * _LANES))
    min_split_rows = _cdiv(2 * _SPLIT_MIN_STEP_BYTES, itemsize * _LANES)
    if total_rows >= max(min_split_rows, 2 * packing):
        target = min(target, _round_up(_cdiv(total_rows, 2), packing))
    tile_rows = min(target, _round_up(total_rows, packing))
    if tile_rows > _CHUNK_ROWS:
        tile_rows = _round_up(tile_rows, _CHUNK_ROWS)
        chunk_rows = _CHUNK_ROWS
    else:
        chunk_rows = tile_rows
    return tile_rows, chunk_rows


def _block_partial(p_ref, t_ref, w_ref, tile_rows, chunk_rows, row_offset,
                   total_rows):
    """f32 (8,128) lane-resident partial sum of (p-t)^2 [* w] over one block.

    Streams the block through a rolling (8,128) accumulator in chunk_rows-row
    chunks so the live vector set stays small (no full-tile f32 temp).
    row_offset is None for full (unmasked) blocks; otherwise it is the traced
    first-row index of this block and rows >= total_rows are select-masked.
    """
    n_chunks = tile_rows // chunk_rows
    groups = chunk_rows // _SUBLANES

    def chunk_sum(start):
        if n_chunks == 1:
            p, t = p_ref[...], t_ref[...]
            w = None if w_ref is None else w_ref[...]
        else:
            sl = pl.ds(start, chunk_rows)
            p, t = p_ref[sl, :], t_ref[sl, :]
            w = None if w_ref is None else w_ref[sl, :]
        # Keep the f32 upcast of both operands (exact difference); a bf16 diff
        # would save ~1 VPU op/elem on v6e/v7x at a small precision cost.
        d = p.astype(jnp.float32) - t.astype(jnp.float32)
        v = d * d
        if w is not None:
            v = v * w.astype(jnp.float32)
        if row_offset is not None:
            rows = jax.lax.broadcasted_iota(jnp.int32, (chunk_rows, _LANES), 0)
            # Select (not multiply) so NaN/Inf garbage in block padding is dropped.
            v = jnp.where(rows + (row_offset + start) < total_rows, v, 0.0)
        # Reduce to a single lane-dense (8,128) vreg: pure vector adds, no XLU.
        return jnp.sum(v.reshape(groups, _SUBLANES, _LANES), axis=0)

    if n_chunks == 1:
        return chunk_sum(0)

    def body(c, acc):
        return acc + chunk_sum(pl.multiple_of(c * chunk_rows, chunk_rows))

    return jax.lax.fori_loop(0, n_chunks, body,
                             jnp.zeros((_SUBLANES, _LANES), jnp.float32),
                             unroll=True)


def _make_kernel(total_rows, tile_rows, chunk_rows, masked_last, weighted):
    """Build the per-block kernel; all arguments are Python-time static."""

    def kernel(*refs):
        if weighted:
            p_ref, t_ref, w_ref, o_ref = refs
        else:
            p_ref, t_ref, o_ref = refs
            w_ref = None

        def partial_sum(row_offset):
            return _block_partial(p_ref, t_ref, w_ref, tile_rows, chunk_rows,
                                  row_offset, total_rows)

        if not masked_last:
            # Static fast path: every block is full, no row mask anywhere.
            o_ref[...] = partial_sum(None)
        else:
            i = pl.program_id(0)
            last = pl.num_programs(0) - 1

            @pl.when(i < last)
            def _():
                o_ref[...] = partial_sum(None)          # steady state: unmasked

            @pl.when(i == last)
            def _():
                o_ref[...] = partial_sum(i * tile_rows)  # only block needing a mask

    return kernel


def _pallas_sum(pred2, target2, weight2):
    """f32 global sum of the element-wise loss over a lane-dense (rows,128) slab."""
    total_rows = pred2.shape[0]
    itemsize = jnp.dtype(pred2.dtype).itemsize
    tile_rows, chunk_rows = _choose_tiling(total_rows, itemsize)
    grid = _cdiv(total_rows, tile_rows)
    masked_last = (total_rows % tile_rows) != 0
    weighted = weight2 is not None

    in_block = pl.BlockSpec((tile_rows, _LANES), lambda i: (i, 0))
    out_block = pl.BlockSpec((_SUBLANES, _LANES), lambda i: (i, 0))

    operands = (pred2, target2) + ((weight2,) if weighted else ())
    partials = pl.pallas_call(
        _make_kernel(total_rows, tile_rows, chunk_rows, masked_last, weighted),
        out_shape=jax.ShapeDtypeStruct((grid * _SUBLANES, _LANES), jnp.float32),
        grid=(grid,),
        in_specs=[in_block] * len(operands),
        out_specs=out_block,
        compiler_params=pltpu.CompilerParams(
            dimension_semantics=("parallel",)),  # independent per-step partials
    )(*operands)
    # Tiny (grid * 8 * 128 f32) final reduction done by XLA.
    return jnp.sum(partials)


def _flatten(x):
    """C-contiguous flatten (matches torch .view(-1)) split into a free
    lane-dense (rows, 128) main slab plus a <128-element tail (None if empty)."""
    flat = jnp.reshape(x, (-1,))
    n = flat.shape[0]
    r = n % _LANES
    if r == 0:
        return flat.reshape(-1, _LANES), None    # pure reshape, no HBM copy
    m = n - r
    # TODO(synk): for ragged sizes XLA may materialize this prefix slice as a
    #             copy; a fully copy-free path needs a 1-D / manual-DMA kernel.
    main = flat[:m].reshape(m // _LANES, _LANES) if m else None
    return main, flat[m:]


def _fused_sum(pred, target, weight):
    """f32 sum of (pred-target)^2 [* weight]: Pallas main slab + tiny XLA tail."""
    p_main, p_tail = _flatten(pred)
    t_main, t_tail = _flatten(target)
    w_main = w_tail = None
    if weight is not None:
        w_main, w_tail = _flatten(weight)

    total = jnp.float32(0.0)
    if p_main is not None:
        total = total + _pallas_sum(p_main, t_main, w_main)
    if p_tail is not None:
        d = p_tail.astype(jnp.float32) - t_tail.astype(jnp.float32)
        v = d * d
        if w_tail is not None:
            v = v * w_tail.astype(jnp.float32)
        total = total + jnp.sum(v)
    return total


@functools.partial(jax.jit, static_argnames=("reduction",))
def statistical_loss(pred, target, weight=None, avg_factor=None,
                     reduction: str = "mean"):
    """Weighted squared-error statistical loss with mmdet-style reduction."""
    if pred.shape != target.shape:
        raise ValueError(f"pred {pred.shape} and target {target.shape} differ")
    n_elem = pred.size

    scale = None
    w_full = None
    if weight is not None:
        if weight.size == 1:
            # Scalar weight: fold outside the kernel, no extra HBM stream.
            scale = jnp.reshape(weight, ()).astype(jnp.float32)
        elif weight.shape == pred.shape:
            w_full = weight
        else:
            # TODO(synk): broadcastable (e.g. per-channel) weights are still
            #             materialized; an in-kernel broadcast would drop this
            #             extra full-size HBM stream.
            w_full = jnp.broadcast_to(weight, pred.shape)

    total = _fused_sum(pred, target, w_full)
    if scale is not None:
        total = total * scale

    if reduction == "none":
        # TODO(synk): 'none' needs per-element output; not fused here.
        raise ValueError("reduction='none' requires per-element output; "
                         "use 'mean' or 'sum' for the fused kernel.")
    if reduction == "sum":
        if avg_factor is not None:   # match mmdet's weight_reduce_loss behavior
            raise ValueError('avg_factor can not be used with reduction="sum"')
        return total
    # 'mean'
    if avg_factor is not None:
        return total / avg_factor
    return total / jnp.float32(n_elem)


class StatisticalLoss:
    """Thin functional stand-in for the abstract nn.Module base class."""

    def __init__(self, stats: dict = None, reduction: str = "mean"):
        self.stats = stats or {}
        self.reduction = reduction

    def __call__(self, pred, target, weight=None, avg_factor=None,
                 reduction_override=None, **kwargs):
        reduction = reduction_override if reduction_override else self.reduction
        return statistical_loss(pred, target, weight=weight,
                                avg_factor=avg_factor, reduction=reduction)


if __name__ == "__main__":
    key = jax.random.PRNGKey(0)
    k1, k2, k3, k4, k5 = jax.random.split(key, 5)

    # 1) Weighted f32 path, NCHW-like shape (no mask emitted: 2048 % 128 == 0).
    pred = jax.random.normal(k1, (2, 4, 16, 16), jnp.float32)
    target = jax.random.normal(k2, (2, 4, 16, 16), jnp.float32)
    weight = jax.random.uniform(k3, (2, 4, 16, 16), jnp.float32)
    avg_factor = jnp.float32(pred.size)
    loss_fn = StatisticalLoss(stats={})
    loss = loss_fn(pred, target, weight=weight, avg_factor=avg_factor)
    jax.block_until_ready(loss)
    ref = jnp.sum((pred - target) ** 2 * weight) / avg_factor
    assert jnp.allclose(loss, ref, rtol=1e-5, atol=1e-6), (loss, ref)

    # 2) Unweighted bf16 path (native-dtype streaming, f32 accumulate in-kernel).
    pred_bf = pred.astype(jnp.bfloat16)
    target_bf = target.astype(jnp.bfloat16)
    loss_bf = statistical_loss(pred_bf, target_bf, reduction="mean")
    jax.block_until_ready(loss_bf)
    d32 = pred_bf.astype(jnp.float32) - target_bf.astype(jnp.float32)
    ref_bf = jnp.mean(d32 * d32)
    assert jnp.allclose(loss_bf, ref_bf, rtol=1e-3, atol=1e-5), (loss_bf, ref_bf)

    # 3) Multi-block path: >=2 grid steps, chunked accumulator, masked final block.
    pred_l = jax.random.normal(k4, (3, 4, 250, 64), jnp.float32)
    target_l = jax.random.normal(k5, (3, 4, 250, 64), jnp.float32)
    loss_l = statistical_loss(pred_l, target_l, reduction="mean")
    jax.block_until_ready(loss_l)
    ref_l = jnp.mean((pred_l - target_l) ** 2)
    assert jnp.allclose(loss_l, ref_l, rtol=1e-4, atol=1e-6), (loss_l, ref_l)

    # 4) Ragged size (not a multiple of 128): kernel main slab + XLA tail.
    pred_r = jax.random.normal(k1, (5, 100), jnp.float32)
    target_r = jax.random.normal(k2, (5, 100), jnp.float32)
    loss_r = statistical_loss(pred_r, target_r, reduction="sum")
    jax.block_until_ready(loss_r)
    ref_r = jnp.sum((pred_r - target_r) ** 2)
    assert jnp.allclose(loss_r, ref_r, rtol=1e-5, atol=1e-5), (loss_r, ref_r)

    # 5) Scalar weight folded outside the kernel (no weight HBM stream).
    w_scalar = jnp.array(0.5, jnp.float32)
    loss_s = statistical_loss(pred, target, weight=w_scalar, reduction="mean")
    jax.block_until_ready(loss_s)
    ref_s = jnp.mean((pred - target) ** 2 * 0.5)
    assert jnp.allclose(loss_s, ref_s, rtol=1e-5, atol=1e-6), (loss_s, ref_s)

    print("KERNEL_OK")
</pallas_src>

<mosaic_0001>
module attributes {stable_mosaic.version = 11 : i64} {
  func.func @kernel(%arg0: i32, %arg1: memref<16x128xf32, #tpu.memory_space<vmem>>, %arg2: memref<16x128xf32, #tpu.memory_space<vmem>>, %arg3: memref<16x128xf32, #tpu.memory_space<vmem>>, %arg4: memref<8x128xf32, #tpu.memory_space<vmem>>) attributes {dimension_semantics = [#tpu.dimension_semantics<parallel>], iteration_bounds = array<i64: 1>, scalar_prefetch = 0 : i64, scratch_operands = 0 : i64, tpu.core_type = #tpu.core_type<tc>, window_params = [{transform_indices = @transform_0, window_bounds = array<i64: 16, 128>}, {transform_indices = @transform_1, window_bounds = array<i64: 16, 128>}, {transform_indices = @transform_2, window_bounds = array<i64: 16, 128>}, {transform_indices = @transform_3, window_bounds = array<i64: 8, 128>}]} {
    %c0 = arith.constant 0 : index
    %c0_0 = arith.constant 0 : index
    %0 = vector.load %arg1[%c0, %c0_0] : memref<16x128xf32, #tpu.memory_space<vmem>>, vector<16x128xf32>
    %c0_1 = arith.constant 0 : index
    %c0_2 = arith.constant 0 : index
    %1 = vector.load %arg2[%c0_1, %c0_2] : memref<16x128xf32, #tpu.memory_space<vmem>>, vector<16x128xf32>
    %c0_3 = arith.constant 0 : index
    %c0_4 = arith.constant 0 : index
    %2 = vector.load %arg3[%c0_3, %c0_4] : memref<16x128xf32, #tpu.memory_space<vmem>>, vector<16x128xf32>
    %3 = arith.subf %0, %1 : vector<16x128xf32>
    %4 = arith.mulf %3, %3 : vector<16x128xf32>
    %5 = arith.mulf %4, %2 : vector<16x128xf32>
    %6 = vector.shape_cast %5 : vector<16x128xf32> to vector<2x8x128xf32>
    %cst = arith.constant dense<0.000000e+00> : vector<8x128xf32>
    %7 = vector.multi_reduction <add>, %6, %cst [0] : vector<2x8x128xf32> to vector<8x128xf32>
    %c0_5 = arith.constant 0 : index
    %c0_6 = arith.constant 0 : index
    %8 = vector.load %arg4[%c0_5, %c0_6] : memref<8x128xf32, #tpu.memory_space<vmem>>, vector<8x128xf32>
    tpu.vector_store %arg4[%c0_5, %c0_6], %7 {strides = array<i32>} : memref<8x128xf32, #tpu.memory_space<vmem>>, vector<8x128xf32>,
    return
  }
  func.func @transform_0(%arg0: i32) -> (i32, i32) {
    %c0_i32 = arith.constant 0 : i32
    %c0_i32_0 = arith.constant 0 : i32
    return %arg0, %c0_i32 : i32, i32
  }
  func.func @transform_1(%arg0: i32) -> (i32, i32) {
    %c0_i32 = arith.constant 0 : i32
    %c0_i32_0 = arith.constant 0 : i32
    return %arg0, %c0_i32 : i32, i32
  }
  func.func @transform_2(%arg0: i32) -> (i32, i32) {
    %c0_i32 = arith.constant 0 : i32
    %c0_i32_0 = arith.constant 0 : i32
    return %arg0, %c0_i32 : i32, i32
  }
  func.func @transform_3(%arg0: i32) -> (i32, i32) {
    %c0_i32 = arith.constant 0 : i32
    %c0_i32_0 = arith.constant 0 : i32
    return %arg0, %c0_i32 : i32, i32
  }
}

</mosaic_0001>

<llo_original>
// kernel: statistical_loss.1
$region0: #{statistical_loss.1}
  #allocation0 [shape = 'u32[]', space=smem, size = 0x4, offset = 0x4, fixed_abs, tag = 'smem constant byte address 0x4 - core index']
  #allocation1 [shape = 'u32[144,128]{1,0:T(1,128)}', space=vmem, size = 0x12000, scoped, tag = 'internal scratch']
  %s0 = inlined_call_operand.vmem [shape: f32[16,128], index: 0, kind: input, shape index: {}]
  %s1 = inlined_call_operand.vmem [shape: f32[16,128], index: 1, kind: input, shape index: {}]
  %s2 = inlined_call_operand.vmem [shape: f32[16,128], index: 2, kind: input, shape index: {}]
  %s3 = inlined_call_operand.vmem [shape: f32[8,128], index: 3, kind: output, shape index: {}]
  %s4 = sld [smem:[#allocation0]]
  $region22: #{statistical_loss.1} parent=0
    _
  %s6 = ssub.s32 1, %s4
  %s7 = scalar_select 0, %s6, %s4
  // Predicated region
  $region2: #{statistical_loss.1} parent=0 // pred_check
    _
  $region3: #{statistical_loss.1} parent=0 // pred_check_branch
    %9 = sbr.rel (0) target = $region5
  $region4: #{statistical_loss.1} parent=0 // pred_region
    _
  $region5: #{statistical_loss.1} parent=0 // pred_fallthru
    _
  // Predicated region
  $region6: #{statistical_loss.1} parent=0 // pred_check
    _
  $region7: #{statistical_loss.1} parent=0 // pred_check_branch
    %11 = sbr.rel (0) target = $region9
  $region8: #{statistical_loss.1} parent=0 // pred_region
    _
  $region9: #{statistical_loss.1} parent=0 // pred_fallthru
    _
  // Predicated region
  $region10: #{statistical_loss.1} parent=0 // pred_check
    _
  $region11: #{statistical_loss.1} parent=0 // pred_check_branch
    %13 = sbr.rel (0) target = $region13
  $region12: #{statistical_loss.1} parent=0 // pred_region
    _
  $region13: #{statistical_loss.1} parent=0 // pred_fallthru
    _
  %v14 = vld [vmem:[%s0] sm:$0xff]
  %v15 = vld [vmem:[%s0 + $0x8] sm:$0xff]
  %v16 = vld [vmem:[%s1] sm:$0xff]
  %v17 = vld [vmem:[%s1 + $0x8] sm:$0xff]
  %v18 = vld [vmem:[%s2] sm:$0xff]
  %v19 = vld [vmem:[%s2 + $0x8] sm:$0xff]
  %v20 = vsub.f32 %v14, %v16
  %v21 = vsub.f32 %v15, %v17
  %v22 = vmul.f32 %v20, %v20
  %v23 = vmul.f32 %v21, %v21
  %v24 = vmul.f32 %v22, %v18
  %v25 = vmul.f32 %v23, %v19
  %v26 = vadd.f32 %v24, %v25
  %27 = vst [vmem:[%s3] sm:$0xff] %v26
  // Predicated region
  $region14: #{statistical_loss.1} parent=0 // pred_check
    _
  $region15: #{statistical_loss.1} parent=0 // pred_check_branch
    %29 = sbr.rel (0) target = $region17
  $region16: #{statistical_loss.1} parent=0 // pred_region
    _
  $region17: #{statistical_loss.1} parent=0 // pred_fallthru
    _
  // Predicated region
  $region18: #{statistical_loss.1} parent=0 // pred_check
    _
  $region19: #{statistical_loss.1} parent=0 // pred_check_branch
    %31 = sbr.rel (0) target = $region21
  $region20: #{statistical_loss.1} parent=0 // pred_region
    _
  $region21: #{statistical_loss.1} parent=0 // pred_fallthru
    _

</llo_original>
